<compile_context>
chip_gen: v5e
topology: v5e:2x2
jax: 0.10.0
libtpu: 0.0.40
codegen_flags: <defaults>
</compile_context>

<pallas_src>
import math

import jax
import jax.numpy as jnp
from jax import lax
from jax.experimental import pallas as pl
from jax.experimental.pallas import tpu as pltpu

_NEG_BIG = -1e30
_VMEM_LIMIT = 64 * 1024 * 1024
_RESIDENT_W_BYTES = 8 * 1024 * 1024


def _pick_tile(dim, preferred, align):
    """Largest tile <= preferred that divides `dim` and is a multiple of
    `align`; falls back to the full dim (full-extent blocks are always legal)."""
    if dim <= preferred:
        return dim
    t = (min(preferred, dim) // align) * align
    while t >= align:
        if dim % t == 0:
            return t
        t -= align
    return dim


# ---------------------------------------------------------------------------
# One-time parameter preparation (hoisted out of the forward path)
# ---------------------------------------------------------------------------
def prepare_params(params, num_heads):
    H = params["query_w"].shape[0]
    d = H // num_heads
    sm_scale = 1.0 / math.sqrt(d)
    # Fold 1/sqrt(d) into the query projection (exact w.r.t. the math, one
    # extra bf16 rounding); concat Q/K/V weights once; cast weights to bf16.
    wq = params["query_w"] * sm_scale
    bq = params["query_b"] * sm_scale
    wqkv = jnp.concatenate([wq, params["key_w"], params["value_w"]],
                           axis=1).astype(jnp.bfloat16)            # [H, 3H]
    bqkv = jnp.concatenate([bq, params["key_b"], params["value_b"]],
                           axis=0).astype(jnp.float32).reshape(1, -1)  # [1, 3H]
    return {"wqkv": wqkv, "bqkv": bqkv}


# ---------------------------------------------------------------------------
# Kernel 1: fused QKV projection   y = x @ Wqkv + bqkv   (bf16 MXU, f32 acc)
# ---------------------------------------------------------------------------
def _fused_linear_kernel(x_ref, w_ref, b_ref, o_ref):
    acc = jnp.dot(x_ref[...], w_ref[...], preferred_element_type=jnp.float32)
    o_ref[...] = (acc + b_ref[...]).astype(o_ref.dtype)


def fused_linear(x2d_bf16, w_bf16, b_f32, *, block_m=512, block_n=512):
    M, Hin = x2d_bf16.shape
    Hout = w_bf16.shape[1]
    tm = _pick_tile(M, block_m, 8)

    if Hin * Hout * 2 <= _RESIDENT_W_BYTES:
        # Whole (bf16) weight resident in VMEM; grid over M only -> the weight
        # is DMA'd from HBM exactly once.
        grid = (M // tm,)
        in_specs = [pl.BlockSpec((tm, Hin), lambda i: (i, 0)),
                    pl.BlockSpec((Hin, Hout), lambda i: (0, 0)),
                    pl.BlockSpec((1, Hout), lambda i: (0, 0))]
        out_specs = pl.BlockSpec((tm, Hout), lambda i: (i, 0))
        dims = ("parallel",)
    else:
        tn = _pick_tile(Hout, block_n, 128)
        grid = (M // tm, Hout // tn)
        in_specs = [pl.BlockSpec((tm, Hin), lambda i, j: (i, 0)),
                    pl.BlockSpec((Hin, tn), lambda i, j: (0, j)),
                    pl.BlockSpec((1, tn), lambda i, j: (0, j))]
        out_specs = pl.BlockSpec((tm, tn), lambda i, j: (i, j))
        dims = ("parallel", "parallel")

    return pl.pallas_call(
        _fused_linear_kernel,
        out_shape=jax.ShapeDtypeStruct((M, Hout), jnp.bfloat16),
        grid_spec=pltpu.PrefetchScalarGridSpec(
            num_scalar_prefetch=0, grid=grid,
            in_specs=in_specs, out_specs=out_specs),
        compiler_params=pltpu.CompilerParams(
            dimension_semantics=dims,
            vmem_limit_bytes=_VMEM_LIMIT),
    )(x2d_bf16, w_bf16, b_f32)


# ---------------------------------------------------------------------------
# Kernel 2: flash-style causal attention over a lower-triangular tile schedule
#   grid = (B, nH, n_pairs); pair p -> (i_idx[p], j_idx[p]) with j <= i
# ---------------------------------------------------------------------------
def _flash_attn_kernel(i_idx_ref, j_idx_ref, q_ref, k_ref, v_ref, mask_ref,
                       o_ref, m_ref, l_ref, acc_ref):
    p = pl.program_id(2)
    i = i_idx_ref[p]   # q-tile index
    j = j_idx_ref[p]   # kv-tile index (j <= i by construction)

    @pl.when(j == 0)
    def _init():
        m_ref[...] = jnp.full(m_ref.shape, _NEG_BIG, m_ref.dtype)
        l_ref[...] = jnp.zeros_like(l_ref)
        acc_ref[...] = jnp.zeros_like(acc_ref)

    def _update(apply_causal):
        q = q_ref[...]                              # [blk, d] bf16 (scale folded)
        k = k_ref[...]                              # [blk, d] bf16
        v = v_ref[...]                              # [blk, d] bf16
        # q @ k^T without relayout of k (contract last dims on the MXU).
        s = lax.dot_general(q, k, (((1,), (1,)), ((), ())),
                            preferred_element_type=jnp.float32)   # [blk, blk] f32
        s = s + mask_ref[...]                       # additive padding mask [1, blk]
        if apply_causal:
            # Only the diagonal tile needs masking; relative indices suffice.
            row = lax.broadcasted_iota(jnp.int32, s.shape, 0)
            col = lax.broadcasted_iota(jnp.int32, s.shape, 1)
            s = jnp.where(col > row, _NEG_BIG, s)
        m_prev = m_ref[...]
        m_new = jnp.maximum(m_prev, jnp.max(s, axis=-1, keepdims=True))
        alpha = jnp.exp(m_prev - m_new)
        prob = jnp.exp(s - m_new)
        l_ref[...] = alpha * l_ref[...] + jnp.sum(prob, axis=-1, keepdims=True)
        acc_ref[...] = alpha * acc_ref[...] + jnp.dot(
            prob.astype(v.dtype), v, preferred_element_type=jnp.float32)
        m_ref[...] = m_new

    @pl.when(j < i)
    def _off_diag():
        _update(apply_causal=False)

    @pl.when(j == i)
    def _diag():
        _update(apply_causal=True)

    @pl.when(j == i)   # diagonal tile is the last kv step for this q row
    def _finalize():
        inv_l = pl.reciprocal(l_ref[...], approx=True)   # EUP slot, once per tile
        o_ref[...] = (acc_ref[...] * inv_l).astype(o_ref.dtype)


def causal_flash_attention(qkv, attention_mask, *, attn_block=256):
    # qkv: [3, B, nH, T, d] bf16 (0 = query(pre-scaled), 1 = key, 2 = value)
    # attention_mask: [B, 1, 1, T] additive, f32
    _, B, nH, T, d = qkv.shape
    blk = _pick_tile(T, attn_block, 128)
    n_t = T // blk

    # Flattened lower-triangular (i, j) schedule -> no empty j > i grid steps.
    pairs = [(i, j) for i in range(n_t) for j in range(i + 1)]
    i_idx = jnp.asarray([ij[0] for ij in pairs], dtype=jnp.int32)
    j_idx = jnp.asarray([ij[1] for ij in pairs], dtype=jnp.int32)
    n_pairs = len(pairs)

    q_spec = pl.BlockSpec((None, None, None, blk, d),
                          lambda b, h, p, ii, jj: (0, b, h, ii[p], 0))
    k_spec = pl.BlockSpec((None, None, None, blk, d),
                          lambda b, h, p, ii, jj: (1, b, h, jj[p], 0))
    v_spec = pl.BlockSpec((None, None, None, blk, d),
                          lambda b, h, p, ii, jj: (2, b, h, jj[p], 0))
    m_spec = pl.BlockSpec((None, None, 1, blk),
                          lambda b, h, p, ii, jj: (b, 0, 0, jj[p]))
    o_spec = pl.BlockSpec((None, None, blk, d),
                          lambda b, h, p, ii, jj: (b, h, ii[p], 0))

    return pl.pallas_call(
        _flash_attn_kernel,
        out_shape=jax.ShapeDtypeStruct((B, nH, T, d), jnp.float32),
        grid_spec=pltpu.PrefetchScalarGridSpec(
            num_scalar_prefetch=2,
            grid=(B, nH, n_pairs),
            in_specs=[q_spec, k_spec, v_spec, m_spec],
            out_specs=o_spec,
            scratch_shapes=[
                pltpu.VMEM((blk, 1), jnp.float32),   # running max m
                pltpu.VMEM((blk, 1), jnp.float32),   # running denom l
                pltpu.VMEM((blk, d), jnp.float32),   # output accumulator
            ],
        ),
        compiler_params=pltpu.CompilerParams(
            dimension_semantics=("parallel", "parallel", "arbitrary"),
            vmem_limit_bytes=_VMEM_LIMIT),
    )(i_idx, j_idx, qkv, qkv, qkv, attention_mask)


# ---------------------------------------------------------------------------
# Module wrapper (matches PyTorch CausalSelfAttention.forward, eval mode)
# ---------------------------------------------------------------------------
def causal_self_attention(hidden_states, attention_mask, prepared, num_heads,
                          *, attn_block=256):
    B, T, H = hidden_states.shape
    d = H // num_heads

    x2d = hidden_states.reshape(B * T, H).astype(jnp.bfloat16)
    qkv2d = fused_linear(x2d, prepared["wqkv"], prepared["bqkv"])   # [B*T, 3H] bf16

    # Single (bf16) layout transform feeding the per-(b, h) BlockSpecs.
    qkv = jnp.transpose(qkv2d.reshape(B, T, 3, num_heads, d), (2, 0, 3, 1, 4))

    out = causal_flash_attention(qkv, attention_mask.astype(jnp.float32),
                                 attn_block=attn_block)             # [B, nH, T, d] f32
    return jnp.transpose(out, (0, 2, 1, 3)).reshape(B, T, H)


# ---------------------------------------------------------------------------
# Pure-JAX f32 reference (mirrors the PyTorch module)
# ---------------------------------------------------------------------------
def _reference(hidden_states, attention_mask, params, num_heads):
    B, T, H = hidden_states.shape
    d = H // num_heads

    def project(name):
        y = hidden_states @ params[name + "_w"] + params[name + "_b"]
        return jnp.transpose(y.reshape(B, T, num_heads, d), (0, 2, 1, 3))

    q, k, v = project("query"), project("key"), project("value")
    scores = jnp.einsum("bhtd,bhsd->bhts", q, k) / math.sqrt(d)
    causal = jnp.where(
        jnp.arange(T)[None, :] > jnp.arange(T)[:, None], -jnp.inf, 0.0)
    scores = scores + attention_mask + causal
    probs = jax.nn.softmax(scores, axis=-1)
    out = jnp.einsum("bhts,bhsd->bhtd", probs, v)
    return jnp.transpose(out, (0, 2, 1, 3)).reshape(B, T, H)


if __name__ == "__main__":
    key = jax.random.PRNGKey(0)
    keys = jax.random.split(key, 10)

    # ---- small config matching the module: batch=2, seq=8, hidden=32, heads=4
    B, T, H, nH = 2, 8, 32, 4
    params = {
        "query_w": jax.random.normal(keys[0], (H, H), jnp.float32) * 0.05,
        "query_b": jax.random.normal(keys[1], (H,), jnp.float32) * 0.05,
        "key_w":   jax.random.normal(keys[2], (H, H), jnp.float32) * 0.05,
        "key_b":   jax.random.normal(keys[3], (H,), jnp.float32) * 0.05,
        "value_w": jax.random.normal(keys[4], (H, H), jnp.float32) * 0.05,
        "value_b": jax.random.normal(keys[5], (H,), jnp.float32) * 0.05,
    }
    prepared = prepare_params(params, nH)   # hoisted: concat + scale-fold + bf16

    hidden_states = jax.random.normal(keys[6], (B, T, H), jnp.float32)
    pad = jnp.zeros((B, T), jnp.float32).at[1, -2:].set(-10000.0)
    attention_mask = pad.reshape(B, 1, 1, T)

    out = causal_self_attention(hidden_states, attention_mask, prepared, nH)
    out = jax.block_until_ready(out)
    ref = _reference(hidden_states, attention_mask, params, nH)
    assert out.shape == (B, T, H)
    assert jnp.allclose(out, ref, atol=2e-2, rtol=2e-2)   # bf16-operand tolerance

    # ---- second check: multi-tile triangular schedule + diagonal-only mask
    B2, T2 = 1, 256
    hidden2 = jax.random.normal(keys[7], (B2, T2, H), jnp.float32)
    pad2 = jnp.zeros((B2, T2), jnp.float32).at[0, -7:].set(-10000.0)
    mask2 = pad2.reshape(B2, 1, 1, T2)

    out2 = causal_self_attention(hidden2, mask2, prepared, nH, attn_block=128)
    out2 = jax.block_until_ready(out2)
    ref2 = _reference(hidden2, mask2, params, nH)
    assert jnp.allclose(out2, ref2, atol=2e-2, rtol=2e-2)

    print("KERNEL_OK")
</pallas_src>

<mosaic_0001>
module attributes {stable_mosaic.version = 11 : i64} {
  func.func @_fused_linear_kernel(%arg0: i32, %arg1: memref<16x32xbf16, #tpu.memory_space<vmem>>, %arg2: memref<32x96xbf16, #tpu.memory_space<vmem>>, %arg3: memref<1x96xf32, #tpu.memory_space<vmem>>, %arg4: memref<16x96xbf16, #tpu.memory_space<vmem>>) attributes {dimension_semantics = [#tpu.dimension_semantics<parallel>], iteration_bounds = array<i64: 1>, scalar_prefetch = 0 : i64, scratch_operands = 0 : i64, tpu.core_type = #tpu.core_type<tc>, window_params = [{transform_indices = @transform_0, window_bounds = array<i64: 16, 32>}, {pipeline_mode = #tpu.pipeline_mode<synchronous>, transform_indices = @transform_1, window_bounds = array<i64: 32, 96>}, {pipeline_mode = #tpu.pipeline_mode<synchronous>, transform_indices = @transform_2, window_bounds = array<i64: 1, 96>}, {transform_indices = @transform_3, window_bounds = array<i64: 16, 96>}]} {
    %c0 = arith.constant 0 : index
    %c0_0 = arith.constant 0 : index
    %0 = vector.load %arg1[%c0, %c0_0] : memref<16x32xbf16, #tpu.memory_space<vmem>>, vector<16x32xbf16>
    %c0_1 = arith.constant 0 : index
    %c0_2 = arith.constant 0 : index
    %1 = vector.load %arg2[%c0_1, %c0_2] : memref<32x96xbf16, #tpu.memory_space<vmem>>, vector<32x96xbf16>
    %cst = arith.constant dense<0.000000e+00> : vector<16x96xf32>
    %2 = tpu.matmul %0, %1, %cst {dimension_numbers = #tpu.dot_dimension_numbers<[1], [0], [0], [1], [0, 0, 1, 1], [], []>} : vector<16x32xbf16>, vector<32x96xbf16>, vector<16x96xf32> -> vector<16x96xf32>
    %c0_3 = arith.constant 0 : index
    %c0_4 = arith.constant 0 : index
    %3 = vector.load %arg3[%c0_3, %c0_4] : memref<1x96xf32, #tpu.memory_space<vmem>>, vector<1x96xf32>
    %4 = vector.broadcast %3 : vector<1x96xf32> to vector<16x96xf32>
    %5 = arith.addf %2, %4 : vector<16x96xf32>
    %6 = arith.truncf %5 : vector<16x96xf32> to vector<16x96xbf16>
    %c0_5 = arith.constant 0 : index
    %c0_6 = arith.constant 0 : index
    %7 = vector.load %arg4[%c0_5, %c0_6] : memref<16x96xbf16, #tpu.memory_space<vmem>>, vector<16x96xbf16>
    tpu.vector_store %arg4[%c0_5, %c0_6], %6 {strides = array<i32>} : memref<16x96xbf16, #tpu.memory_space<vmem>>, vector<16x96xbf16>,
    return
  }
  func.func @transform_0(%arg0: i32) -> (i32, i32) {
    %c0_i32 = arith.constant 0 : i32
    %c0_i32_0 = arith.constant 0 : i32
    return %arg0, %c0_i32 : i32, i32
  }
  func.func @transform_1(%arg0: i32) -> (i32, i32) {
    %c0_i32 = arith.constant 0 : i32
    %c0_i32_0 = arith.constant 0 : i32
    %c0_i32_1 = arith.constant 0 : i32
    return %c0_i32, %c0_i32_0 : i32, i32
  }
  func.func @transform_2(%arg0: i32) -> (i32, i32) {
    %c0_i32 = arith.constant 0 : i32
    %c0_i32_0 = arith.constant 0 : i32
    %c0_i32_1 = arith.constant 0 : i32
    return %c0_i32, %c0_i32_0 : i32, i32
  }
  func.func @transform_3(%arg0: i32) -> (i32, i32) {
    %c0_i32 = arith.constant 0 : i32
    %c0_i32_0 = arith.constant 0 : i32
    return %arg0, %c0_i32 : i32, i32
  }
}

</mosaic_0001>

<llo_original>
// kernel: tpu_custom_call.1
$region0: #{tpu_custom_call.1}
  #allocation0 [shape = 'u32[]', space=smem, size = 0x4, offset = 0x4, fixed_abs, tag = 'smem constant byte address 0x4 - core index']
  #allocation1 [shape = 'u32[72,128]{1,0:T(1,128)}', space=vmem, size = 0x9000, scoped, tag = 'internal scratch']
  %s0 = inlined_call_operand.hbm [shape: bf16[16,32], index: 0, kind: input, shape index: {}]
  %s1 = inlined_call_operand.hbm [shape: bf16[32,96], index: 1, kind: input, shape index: {}]
  %s2 = inlined_call_operand.vmem [shape: f32[1,96], index: 2, kind: input, shape index: {}]
  %s3 = inlined_call_operand.hbm [shape: bf16[16,96], index: 3, kind: output, shape index: {}]
  %s4 = sld [smem:[#allocation0]]
  $region30: #{tpu_custom_call.1} parent=0
    _
  %s6 = ssub.s32 1, %s4
  %s7 = scalar_select 0, %s6, %s4
  $region1: #{tpu_custom_call.1} parent=0
    #allocation2 [shape = 'u8[4096]{0}', space=vmem, size = 0x1000, scoped, tag = 'input window, operand 0, single buffered']
    #allocation3 [shape = 's32[1]{0}', space=sflag, size = 0x4, scoped, tag = 'scoped memory for tpu_custom_call.1']
    #allocation4 [shape = 's32[1]{0}', space=sflag, size = 0x4, scoped, tag = 'scoped memory for tpu_custom_call.1']
    #allocation5 [shape = 'u8[8192]{0}', space=vmem, size = 0x2000, scoped, tag = 'input window, operand 1, single buffered']
    #allocation6 [shape = 's32[1]{0}', space=sflag, size = 0x4, scoped, tag = 'scoped memory for tpu_custom_call.1']
    #allocation7 [shape = 'u8[4096]{0}', space=vmem, size = 0x1000, scoped, tag = 'output window, operand 0, single buffered']
    %8 = vsyncpa [#allocation3], 0
    %9 = vsyncpa [#allocation6], 0
    %10 = vsyncpa [#allocation4], 0
    // Predicated region
    $region2: #{tpu_custom_call.1} parent=1 // pred_check
      _
    $region3: #{tpu_custom_call.1} parent=1 // pred_check_branch
      %12 = sbr.rel (0) target = $region5
    $region4: #{tpu_custom_call.1} parent=1 // pred_region
      %14 = vsyncadd [#allocation3], 0
      %s15 = sshll.u32 %s0, 4
      %s16 = int_to_ptr.hbm [resolvable:$true] %s15
      %s17 = sshll.u32 [#allocation2], 4
      %s18 = int_to_ptr.vmem [resolvable:$true] %s17
      %23 = dma.hbm_to_vmem [thread:$0]  %s16, 128, %s18, [#allocation3], 64, 64, 4
    $region5: #{tpu_custom_call.1} parent=1 // pred_fallthru
      _
    // Predicated region
    $region6: #{tpu_custom_call.1} parent=1 // pred_check
      _
    $region7: #{tpu_custom_call.1} parent=1 // pred_check_branch
      %25 = sbr.rel (0) target = $region9
    $region8: #{tpu_custom_call.1} parent=1 // pred_region
      %27 = vsyncadd [#allocation6], 0
      %s28 = sshll.u32 %s1, 4
      %s29 = int_to_ptr.hbm [resolvable:$true] %s28
      %s30 = sshll.u32 [#allocation5], 4
      %s31 = int_to_ptr.vmem [resolvable:$true] %s30
      %36 = dma.hbm_to_vmem [thread:$0]  %s29, 256, %s31, [#allocation6], 64, 64, 4
    $region9: #{tpu_custom_call.1} parent=1 // pred_fallthru
      _
    // Predicated region
    $region10: #{tpu_custom_call.1} parent=1 // pred_check
      _
    $region11: #{tpu_custom_call.1} parent=1 // pred_check_branch
      %38 = sbr.rel (0) target = $region13
    $region12: #{tpu_custom_call.1} parent=1 // pred_region
      _
    $region13: #{tpu_custom_call.1} parent=1 // pred_fallthru
      _
    // Predicated region
    $region14: #{tpu_custom_call.1} parent=1 // pred_check
      _
    $region15: #{tpu_custom_call.1} parent=1 // pred_check_branch
      %40 = sbr.rel (0) target = $region17
    $region16: #{tpu_custom_call.1} parent=1 // pred_region
      %42 = dma.done [#allocation3], 128
    $region17: #{tpu_custom_call.1} parent=1 // pred_fallthru
      _
    // Predicated region
    $region18: #{tpu_custom_call.1} parent=1 // pred_check
      _
    $region19: #{tpu_custom_call.1} parent=1 // pred_check_branch
      %44 = sbr.rel (0) target = $region21
    $region20: #{tpu_custom_call.1} parent=1 // pred_region
      %46 = dma.done [#allocation6], 256
    $region21: #{tpu_custom_call.1} parent=1 // pred_fallthru
      _
    %v48 = vld [vmem:[#allocation2] sm:$0xf]
    %v49 = vld [vmem:[#allocation2 + $0x4] sm:$0xf]
    %v50 = vld [vmem:[#allocation5] sm:$0xf]
    %v51 = vld [vmem:[#allocation5 + $0x4] sm:$0xf]
    %v52 = vld [vmem:[#allocation5 + $0x8] sm:$0xf]
    %v53 = vld [vmem:[#allocation5 + $0xc] sm:$0xf]
    %v54 = vld [vmem:[%s2] sm:$0x1]
    %v56 = vperm.slane %v54, 0
    %v60 = vunpack.c.l.b16 %v48
    %v61 = vunpack.c.l.b16 %v49
    %v62 = vpack.c.b16 %v61, %v60
    %v67 = vunpack.c.l.b16 %v50
    %v68 = vunpack.c.l.b16 %v51
    %v69 = vunpack.c.l.b16 %v52
    %v70 = vunpack.c.l.b16 %v53
    %v71 = vpack.c.b16 %v68, %v67
    %v72 = vpack.c.b16 %v70, %v69
    %vm75 = vcmask 261120
    %v77 = vsel %vm75, %v62, 0
    %79 = vmatpush.bf16.msra.mxu0 0
    %80 = vmatpush.bf16.msra.mxu0 0
    %81 = vmatpush.bf16.msra.mxu0 0
    %82 = vmatpush.bf16.msra.mxu0 0
    %83 = vmatpush.bf16.msra.mxu0 0
    %84 = vmatpush.bf16.msra.mxu0 0
    %85 = vmatpush.bf16.msra.mxu0 %v72
    %86 = vmatpush.bf16.msra.mxu0 %v71
    %87 = vmatmul.bf16.gmra.mxu0 %v77
    %v88 = vpop.f32.mrf.mxu0
    %v89 = vadd.f32 %v56, %v88
    %v90 = vpop.f32.mrf.mxu0
    %v91 = vadd.f32 %v56, %v90
    %92 = vdwg.mxu0
    %v93 = vpack.c.bf16 %v89, %v89
    %v94 = vpack.c.bf16 %v91, %v91
    %vm95 = vcmask 781312
    %96 = vst.msk [vmem:[#allocation7] sm:$0xf] %vm95, %v93
    %97 = vst.msk [vmem:[#allocation7 + $0x4] sm:$0xf] %vm95, %v94
    // Predicated region
    $region22: #{tpu_custom_call.1} parent=1 // pred_check
      _
    $region23: #{tpu_custom_call.1} parent=1 // pred_check_branch
      %99 = sbr.rel (0) target = $region25
    $region24: #{tpu_custom_call.1} parent=1 // pred_region
      %101 = vsyncadd [#allocation4], 0
      %s102 = sshll.u32 [#allocation7], 4
      %s103 = int_to_ptr.vmem [resolvable:$true] %s102
      %s104 = sshll.u32 %s3, 4
      %s105 = int_to_ptr.hbm [resolvable:$true] %s104
      %110 = dma.vmem_to_hbm [thread:$0]  %s103, 128, %s105, [#allocation4], 64, 64, 4
    $region25: #{tpu_custom_call.1} parent=1 // pred_fallthru
      _
    // Predicated region
    $region26: #{tpu_custom_call.1} parent=1 // pred_check
      _
    $region27: #{tpu_custom_call.1} parent=1 // pred_check_branch
      %112 = sbr.rel (0) target = $region29
    $region28: #{tpu_custom_call.1} parent=1 // pred_region
      %114 = dma.done [#allocation4], 128
    $region29: #{tpu_custom_call.1} parent=1 // pred_fallthru
      _
    %115 = vsyncpa [#allocation3], 1
    %116 = vsyncpa [#allocation6], 1
    %117 = vsyncpa [#allocation4], 1

</llo_original>
